<compile_context>
chip_gen: v7x
topology: tpu7x:2x2x1
jax: 0.10.0
libtpu: 0.0.40
codegen_flags: <defaults>
</compile_context>

<pallas_src>
import functools

import jax
import jax.numpy as jnp
from jax.experimental import pallas as pl
from jax.experimental.pallas import tpu as pltpu

_MIB = 1024 * 1024


def _round_up(x, m):
    return -(-x // m) * m


def _vmem_capacity_bytes():
    """Physical VMEM per TensorCore; conservative fallback if unknown."""
    try:
        info = pltpu.get_tpu_info()
        for attr in ("vmem_capacity_bytes", "vmem_bytes", "vmem_size_bytes"):
            v = getattr(info, attr, None)
            if v:
                return max(int(v), 32 * _MIB)
    except Exception:
        pass
    return 64 * _MIB  # v7x per-TC VMEM: safe lower bound for every generation


def _pick_tiles(nc, hw, itemsize):
    """Choose (tile_nc, tile_hw, hw_tiles, vmem_limit_bytes)."""
    sublane = max(8, 32 // itemsize)  # 8 f32, 16 bf16, 32 int8/fp8

    # --- spatial (lane) tile: keep full H*W unless it is very large; any split
    #     tile must be a multiple of 128 that divides H*W exactly.
    MAX_HW_TILE = 8192
    tile_hw = hw
    if hw > MAX_HW_TILE:
        for t in range(MAX_HW_TILE, 127, -128):
            if hw % t == 0:
                tile_hw = t
                break
    hw_tiles = hw // tile_hw

    # --- VMEM budget (generation aware) ---
    cap = _vmem_capacity_bytes()
    # v7x (64 MiB)  -> 48 MiB resident budget
    # v5e/v6e (128) -> 64 MiB resident budget (vmem_limit_bytes raised below)
    total_budget = min(cap * 3 // 4, 64 * _MIB)

    # Real (8,128)-tiled VMEM bytes kept resident per NC row:
    #   2 x double-buffered input block rows (lanes padded to 128)
    # + 2 x output block rows ((tile_nc,1) pads to 128 lanes)
    # + (only when the HW axis is split) one f32 (tile_nc,128) accumulator row.
    lanes_in = _round_up(tile_hw, 128)
    per_row = 2 * lanes_in * itemsize + 2 * 128 * itemsize
    if hw_tiles > 1:
        per_row += 128 * 4

    rows = max(sublane, (total_budget // per_row) // sublane * sublane)
    nc_rounded = _round_up(max(nc, 1), sublane)
    tile_nc = min(rows, nc_rounded)

    # Megacore: make sure the "parallel" NC axis has >= 2 tiles when possible
    # so both v7x TensorCores get work (doubles EUP throughput).
    if -(-nc // tile_nc) < 2 and tile_nc >= 2 * sublane:
        tile_nc = _round_up(-(-nc // 2), sublane)
    tile_nc = max(sublane, (tile_nc // sublane) * sublane)

    resident = tile_nc * per_row + 2 * _MIB  # + headroom for internal scratch
    vmem_limit = int(min(cap, max(resident + 8 * _MIB, 32 * _MIB)))
    return tile_nc, tile_hw, hw_tiles, vmem_limit


def _pow_clamped(x, p_ref, eps, p_static):
    """clamp(x, min=eps) ** p, computed in f32."""
    xc = jnp.maximum(x, jnp.float32(eps))
    if p_static is not None:
        xp = xc
        for _ in range(p_static - 1):  # VPU-only integer power (no EUP work)
            xp = xp * xc
        return xp
    return jnp.exp(p_ref[0] * jnp.log(xc))


def _root(m, p_ref, p_static):
    """m ** (1/p) for strictly positive m (one transcendental pair per row)."""
    if p_static is not None:
        return jnp.exp(jnp.log(m) * jnp.float32(1.0 / p_static))
    return jnp.exp(jnp.log(m) / p_ref[0])


def _gem_kernel_single(p_ref, x_ref, o_ref, *, eps, hw_total, p_static):
    """Whole H*W reduction in one block (the common GeM case)."""
    x = x_ref[...].astype(jnp.float32)
    xp = _pow_clamped(x, p_ref, eps, p_static)
    m = jnp.sum(xp, axis=-1, keepdims=True) * jnp.float32(1.0 / hw_total)
    o_ref[...] = _root(m, p_ref, p_static).astype(o_ref.dtype)


def _gem_kernel_multi(p_ref, x_ref, o_ref, acc_ref, *, eps, hw_total, p_static,
                      lane_chunks):
    """H*W split across grid axis 1; lane-dense (tile_nc,128) accumulator."""
    k = pl.program_id(1)

    @pl.when(k == 0)
    def _init():
        acc_ref[...] = jnp.zeros_like(acc_ref)

    x = x_ref[...].astype(jnp.float32)
    xp = _pow_clamped(x, p_ref, eps, p_static)

    # Hot loop: only lane-aligned VPU adds; no cross-lane reduce, no masked
    # 1-of-128-lane scratch stores.
    part = xp[:, 0:128]
    for j in range(1, lane_chunks):
        part = part + xp[:, j * 128:(j + 1) * 128]
    acc_ref[...] += part

    @pl.when(k == pl.num_programs(1) - 1)
    def _finalize():
        s = jnp.sum(acc_ref[...], axis=-1, keepdims=True)  # single XLU reduce
        m = s * jnp.float32(1.0 / hw_total)                 # true mean over H*W
        o_ref[...] = _root(m, p_ref, p_static).astype(o_ref.dtype)


def gem_pallas(x, p, eps=1e-6):
    """x: (N, C, H, W); p: shape-(1,) trainable param OR a Python int/float
    (p_trainable=False).  Returns (N, C, 1, 1), matching torch GeM.forward."""
    N, C, H, W = x.shape
    NC, HW = N * C, H * W
    x2d = x.reshape(NC, HW)  # free reshape (contiguous); no padding copy

    # Frozen small-integer p -> VPU-only per-element power (no EUP pow).
    p_static = None
    if isinstance(p, (int, float)) and float(p) == int(p) and 1 <= int(p) <= 8:
        p_static = int(p)
        p_arr = jnp.full((1,), float(p_static), dtype=jnp.float32)
    else:
        p_arr = jnp.asarray(p, dtype=jnp.float32).reshape((1,))

    itemsize = x.dtype.itemsize
    tile_nc, tile_hw, hw_tiles, vmem_limit = _pick_tiles(NC, HW, itemsize)
    nc_tiles = pl.cdiv(NC, tile_nc)  # last block may be partially OOB (rows dropped)

    cost = pl.CostEstimate(
        flops=int((2 + (p_static - 1 if p_static is not None else 1)) * NC * HW + 4 * NC),
        transcendentals=int((0 if p_static is not None else 2 * NC * HW) + 2 * NC),
        bytes_accessed=int(itemsize * NC * HW + itemsize * NC + 4),
    )

    if hw_tiles == 1:
        kernel = functools.partial(_gem_kernel_single, eps=float(eps),
                                   hw_total=HW, p_static=p_static)
        out = pl.pallas_call(
            kernel,
            out_shape=jax.ShapeDtypeStruct((NC, 1), x.dtype),
            grid=(nc_tiles,),
            in_specs=[
                pl.BlockSpec(memory_space=pltpu.SMEM),                 # p (scalar)
                pl.BlockSpec((tile_nc, tile_hw), lambda i: (i, 0)),    # x tile
            ],
            out_specs=pl.BlockSpec((tile_nc, 1), lambda i: (i, 0)),
            compiler_params=pltpu.CompilerParams(
                dimension_semantics=("parallel",),
                vmem_limit_bytes=vmem_limit,
            ),
            cost_estimate=cost,
        )(p_arr, x2d)
    else:
        kernel = functools.partial(_gem_kernel_multi, eps=float(eps),
                                   hw_total=HW, p_static=p_static,
                                   lane_chunks=tile_hw // 128)
        out = pl.pallas_call(
            kernel,
            out_shape=jax.ShapeDtypeStruct((NC, 1), x.dtype),
            grid=(nc_tiles, hw_tiles),
            in_specs=[
                pl.BlockSpec(memory_space=pltpu.SMEM),                     # p
                pl.BlockSpec((tile_nc, tile_hw), lambda i, k: (i, k)),     # x tile
            ],
            out_specs=pl.BlockSpec((tile_nc, 1), lambda i, k: (i, 0)),
            scratch_shapes=[pltpu.VMEM((tile_nc, 128), jnp.float32)],
            compiler_params=pltpu.CompilerParams(
                dimension_semantics=("parallel", "arbitrary"),
                vmem_limit_bytes=vmem_limit,
            ),
            cost_estimate=cost,
        )(p_arr, x2d)

    return out.reshape(N, C, 1, 1)


def _gem_ref(x, p0, eps=1e-6):
    xc = jnp.maximum(x.astype(jnp.float32), eps)
    m = jnp.mean(xc ** p0, axis=(2, 3), keepdims=True)
    return (m ** (1.0 / p0)).astype(x.dtype)


if __name__ == "__main__":
    key = jax.random.PRNGKey(0)
    eps = 1e-6

    # GeM.__init__(p=3, p_trainable=True): p = Parameter(torch.ones(1) * 3)
    p_param = jnp.ones((1,), dtype=jnp.float32) * 3.0

    # 1) Trainable-p (general) path, 16x16 feature map.
    N, C, H, W = 2, 4, 16, 16
    x = jax.random.normal(key, (N, C, H, W), dtype=jnp.float32)
    y = gem_pallas(x, p_param, eps=eps)
    jax.block_until_ready(y)
    assert y.shape == (N, C, 1, 1)
    assert jnp.allclose(y, _gem_ref(x, 3.0, eps), rtol=1e-4, atol=1e-5), \
        "mismatch vs reference (trainable p, 16x16)"

    # 2) Common backbone output where H*W is not a multiple of 128 (7x7).
    x2 = jax.random.normal(jax.random.PRNGKey(1), (2, 4, 7, 7), dtype=jnp.float32)
    y2 = gem_pallas(x2, p_param, eps=eps)
    jax.block_until_ready(y2)
    assert y2.shape == (2, 4, 1, 1)
    assert jnp.allclose(y2, _gem_ref(x2, 3.0, eps), rtol=1e-4, atol=1e-5), \
        "mismatch vs reference (trainable p, 7x7)"

    # 3) Frozen integer p (p_trainable=False) -> VPU-only fast path.
    y3 = gem_pallas(x, 3, eps=eps)
    jax.block_until_ready(y3)
    assert jnp.allclose(y3, _gem_ref(x, 3.0, eps), rtol=1e-4, atol=1e-5), \
        "mismatch vs reference (static p=3)"

    # 4) Large feature map: exercises the split-HW path with the lane-dense
    #    accumulator (H*W = 16384 -> two 8192-wide reduction steps).
    x4 = jax.random.normal(jax.random.PRNGKey(2), (1, 8, 128, 128), dtype=jnp.float32)
    y4 = gem_pallas(x4, p_param, eps=eps)
    jax.block_until_ready(y4)
    assert y4.shape == (1, 8, 1, 1)
    assert jnp.allclose(y4, _gem_ref(x4, 3.0, eps), rtol=1e-4, atol=1e-5), \
        "mismatch vs reference (128x128, split HW)"

    print("KERNEL_OK")
</pallas_src>

<mosaic_0001>
module attributes {stable_mosaic.version = 11 : i64} {
  func.func @_gem_kernel_single(%arg0: i32, %arg1: memref<1xf32, #tpu.memory_space<smem>>, %arg2: memref<8x256xf32, #tpu.memory_space<vmem>>, %arg3: memref<8x1xf32, #tpu.memory_space<vmem>>) attributes {dimension_semantics = [#tpu.dimension_semantics<parallel>], iteration_bounds = array<i64: 1>, scalar_prefetch = 0 : i64, scratch_operands = 0 : i64, tpu.core_type = #tpu.core_type<tc>, window_params = [{transform_indices = @transform_0, window_bounds = array<i64: 1>}, {transform_indices = @transform_1, window_bounds = array<i64: 8, 256>}, {transform_indices = @transform_2, window_bounds = array<i64: 8, 1>}]} {
    %c0 = arith.constant 0 : index
    %c0_0 = arith.constant 0 : index
    %0 = vector.load %arg2[%c0, %c0_0] : memref<8x256xf32, #tpu.memory_space<vmem>>, vector<8x256xf32>
    %cst = arith.constant 9.99999997E-7 : f32
    %1 = vector.broadcast %cst : f32 to vector<8x256xf32>
    %2 = arith.maximumf %0, %1 : vector<8x256xf32>
    %c0_1 = arith.constant 0 : index
    %3 = memref.load %arg1[%c0_1] : memref<1xf32, #tpu.memory_space<smem>>
    %4 = math.log %2 : vector<8x256xf32>
    %5 = vector.broadcast %3 : f32 to vector<8x256xf32>
    %6 = arith.mulf %5, %4 : vector<8x256xf32>
    %7 = math.exp %6 : vector<8x256xf32>
    %cst_2 = arith.constant dense<0.000000e+00> : vector<8xf32>
    %8 = vector.multi_reduction <add>, %7, %cst_2 [1] : vector<8x256xf32> to vector<8xf32>
    %9 = vector.shape_cast %8 : vector<8xf32> to vector<8x1xf32>
    %cst_3 = arith.constant 3.906250e-03 : f32
    %10 = vector.broadcast %cst_3 : f32 to vector<8x1xf32>
    %11 = arith.mulf %9, %10 : vector<8x1xf32>
    %12 = math.log %11 : vector<8x1xf32>
    %c0_4 = arith.constant 0 : index
    %13 = memref.load %arg1[%c0_4] : memref<1xf32, #tpu.memory_space<smem>>
    %14 = vector.broadcast %13 : f32 to vector<8x1xf32>
    %15 = arith.divf %12, %14 : vector<8x1xf32>
    %16 = math.exp %15 : vector<8x1xf32>
    %c0_5 = arith.constant 0 : index
    %c0_6 = arith.constant 0 : index
    %17 = vector.load %arg3[%c0_5, %c0_6] : memref<8x1xf32, #tpu.memory_space<vmem>>, vector<8x1xf32>
    tpu.vector_store %arg3[%c0_5, %c0_6], %16 {strides = array<i32>} : memref<8x1xf32, #tpu.memory_space<vmem>>, vector<8x1xf32>,
    return
  }
  func.func @transform_0(%arg0: i32) -> i32 {
    %c0_i32 = arith.constant 0 : i32
    %c0_i32_0 = arith.constant 0 : i32
    return %c0_i32 : i32
  }
  func.func @transform_1(%arg0: i32) -> (i32, i32) {
    %c0_i32 = arith.constant 0 : i32
    %c0_i32_0 = arith.constant 0 : i32
    return %arg0, %c0_i32 : i32, i32
  }
  func.func @transform_2(%arg0: i32) -> (i32, i32) {
    %c0_i32 = arith.constant 0 : i32
    %c0_i32_0 = arith.constant 0 : i32
    return %arg0, %c0_i32 : i32, i32
  }
}

</mosaic_0001>

<llo_original>
// kernel: tpu_custom_call.1
$region0: #{tpu_custom_call.1}
  #allocation0 [shape = 'u32[]', space=smem, size = 0x4, offset = 0x4, fixed_abs, tag = 'smem constant byte address 0x4 - core index']
  #allocation1 [shape = 'u32[144,128]{1,0:T(1,128)}', space=vmem, size = 0x12000, scoped, tag = 'internal scratch']
  #allocation2 [shape = 'f32[1]{0:T(128)S(6)}', space=smem, size = 0x200, scoped, tag = 'scoped memory for tpu_custom_call.1']
  %s0 = inlined_call_operand.<no memory space> [shape: f32[1], index: 0, kind: input, shape index: {}]
  %s1 = inlined_call_operand.hbm [shape: f32[8,256], index: 1, kind: input, shape index: {}]
  %s2 = inlined_call_operand.vmem [shape: f32[8,1], index: 2, kind: output, shape index: {}]
  %s3 = sld [smem:[#allocation0]]
  $region22: #{tpu_custom_call.1} parent=0
    _
  %s5 = ssub.s32 1, %s3
  %s6 = scalar_select 0, %s5, %s3
  %7 = sst [smem:[#allocation2]] %s0
  $region1: #{tpu_custom_call.1} parent=0
    #allocation3 [shape = 'u8[8192]{0}', space=vmem, size = 0x2000, scoped, tag = 'input window, operand 1, single buffered']
    #allocation4 [shape = 's32[1]{0}', space=sflag, size = 0x4, scoped, tag = 'scoped memory for tpu_custom_call.1']
    %8 = vsyncpa [#allocation4], 0
    // Predicated region
    $region2: #{tpu_custom_call.1} parent=1 // pred_check
      _
    $region3: #{tpu_custom_call.1} parent=1 // pred_check_branch
      %10 = sbr.rel (0) target = $region5
    $region4: #{tpu_custom_call.1} parent=1 // pred_region
      _
    $region5: #{tpu_custom_call.1} parent=1 // pred_fallthru
      _
    // Predicated region
    $region6: #{tpu_custom_call.1} parent=1 // pred_check
      _
    $region7: #{tpu_custom_call.1} parent=1 // pred_check_branch
      %12 = sbr.rel (0) target = $region9
    $region8: #{tpu_custom_call.1} parent=1 // pred_region
      %s14 = ssub.s32 256, 256
      %15 = vsyncadd [#allocation4], %s14
      %s17 = sshll.u32 [#allocation3], 4
      %s18 = int_to_ptr.vmem [resolvable:$true] %s17
      %20 = dma.hbm_to_vmem [thread:$0]  %s1, 256, %s18, [#allocation4]
    $region9: #{tpu_custom_call.1} parent=1 // pred_fallthru
      _
    // Predicated region
    $region10: #{tpu_custom_call.1} parent=1 // pred_check
      _
    $region11: #{tpu_custom_call.1} parent=1 // pred_check_branch
      %22 = sbr.rel (0) target = $region13
    $region12: #{tpu_custom_call.1} parent=1 // pred_region
      %23 = dma.done [#allocation4], 256
    $region13: #{tpu_custom_call.1} parent=1 // pred_fallthru
      _
    %v24 = vld [vmem:[#allocation3] sm:$0xff]
    %v25 = vld [vmem:[#allocation3 + $0x8] sm:$0xff]
    %v26 = vmax.f32 %v24, 1e-06
    %v27 = vmax.f32 %v25, 1e-06
    %s28 = sld [smem:[#allocation2]]
    %v29 = vlog2.pop %v26
    %v30 = vmul.f32 %v29, 0.6931472
    %v31 = vlog2.pop %v27
    %v32 = vmul.f32 %v31, 0.6931472
    %v33 = vstv %s28
    %v34 = vmul.f32 %v33, %v30
    %v35 = vmul.f32 %v33, %v32
    %v36 = vmul.f32 %v34, 1.442695
    %v37 = vpow.pop %v36
    %v38 = vmul.f32 %v35, 1.442695
    %v39 = vpow.pop %v38
    %v40 = vadd.f32 %v37, %v39
    %41 = vadd.xlane.f32.xlu0 %v40
    %v42 = vpop.xlane.xlu0 %41
    %v43 = vmul.f32 %v42, 0.00390625
    %v44 = vlog2.pop %v43
    %v45 = vmul.f32 %v44, 0.6931472
    %v46 = vrcp.pop %v33
    %v47 = vmul.f32 %v45, %v46
    %v48 = vmul.f32 %v47, 1.442695
    %v49 = vpow.pop %v48
    %vm50 = vcmask 7168
    %51 = vst.msk [vmem:[%s2] sm:$0xff] %vm50, %v49
    // Predicated region
    $region14: #{tpu_custom_call.1} parent=1 // pred_check
      _
    $region15: #{tpu_custom_call.1} parent=1 // pred_check_branch
      %53 = sbr.rel (0) target = $region17
    $region16: #{tpu_custom_call.1} parent=1 // pred_region
      _
    $region17: #{tpu_custom_call.1} parent=1 // pred_fallthru
      _
    // Predicated region
    $region18: #{tpu_custom_call.1} parent=1 // pred_check
      _
    $region19: #{tpu_custom_call.1} parent=1 // pred_check_branch
      %55 = sbr.rel (0) target = $region21
    $region20: #{tpu_custom_call.1} parent=1 // pred_region
      _
    $region21: #{tpu_custom_call.1} parent=1 // pred_fallthru
      _
    %56 = vsyncpa [#allocation4], 1

</llo_original>
